<compile_context>
chip_gen: v7x
topology: tpu7x:2x2x1
jax: 0.10.0
libtpu: 0.0.40
codegen_flags: <defaults>
</compile_context>

<pallas_src>
import functools

import jax
import jax.numpy as jnp
from jax import lax
from jax.experimental import pallas as pl
from jax.experimental.pallas import tpu as pltpu


TB_MAX = 4096           # max batch-tile rows (working set ~12 MB, VMEM-safe)
VMEM_LIMIT = 32 << 20   # explicit scoped-VMEM budget, valid on all generations


def _round_up(n, m):
    return ((n + m - 1) // m) * m


# ---------------------------------------------------------------------------
# Fused trunk + dueling head kernel, per batch tile.
#   q_ref    : (tb, n_out) lane-dense slab; lanes 0..A-1 hold v + adv
#              (minus the global mean if fuse_mean), lane A holds 2*v (junk),
#              higher lanes hold v (junk); junk lanes are sliced off outside.
#   asum_ref : (1, 1) partial sum of advantages over the *valid* rows of this
#              tile (used for the exact global mean when n_tiles > 1).
# ---------------------------------------------------------------------------
def _fwd_kernel(x_ref, w1_ref, b1_ref, w2_ref, b2_ref,
                wh1_ref, bh1_ref, wh2_ref, bh2_ref,
                q_ref, asum_ref, *, tb, n_valid, a, inv_count, fuse_mean):
    i = pl.program_id(0)

    # Matmul operands in the stored weight dtype (bf16 on the fast path),
    # accumulation and all elementwise math in f32.
    x = x_ref[...].astype(w1_ref.dtype)

    h1 = jnp.maximum(
        jnp.dot(x, w1_ref[...], preferred_element_type=jnp.float32) + b1_ref[...], 0.0)
    h2 = jnp.maximum(
        jnp.dot(h1.astype(w2_ref.dtype), w2_ref[...],
                preferred_element_type=jnp.float32) + b2_ref[...], 0.0)

    # Fused value/advantage first layers: one lane-full N=128 MXU pass.
    h3 = jnp.maximum(
        jnp.dot(h2.astype(wh1_ref.dtype), wh1_ref[...],
                preferred_element_type=jnp.float32) + bh1_ref[...], 0.0)

    # Fused (block-diagonal, lane-padded) output layers -> (tb, n_out).
    # Lanes 0..a-1 = advantages, lane a = value, lanes a+1.. = exact zeros.
    va = jnp.dot(h3.astype(wh2_ref.dtype), wh2_ref[...],
                 preferred_element_type=jnp.float32) + bh2_ref[...]

    v = va[:, a:a + 1]      # (tb, 1)
    adv = va[:, :a]         # (tb, a)

    # Partial advantage sum; mask rows that only exist because of batch padding.
    row = i * tb + lax.broadcasted_iota(jnp.int32, adv.shape, 0)
    adv_valid = jnp.where(row < n_valid, adv, 0.0)
    tile_sum = jnp.sum(adv_valid, axis=(0, 1), keepdims=True)   # (1, 1) f32
    asum_ref[...] = tile_sum

    # Lane-dense slab: lanes 0..a-1 become v + adv; junk in higher lanes.
    q = va + v
    if fuse_mean:
        # Single-tile case: tile_sum IS the global sum -> fuse the mean here.
        q = q - tile_sum * inv_count
    q_ref[...] = q


# ---------------------------------------------------------------------------
# Parameter prep: pre-transpose/fuse once, outside the kernel.
# ---------------------------------------------------------------------------
def prep_params(p, *, matmul_dtype=jnp.bfloat16):
    """Fuse the value/advantage head weights and cast matmul weights."""
    fc3 = p["wv1"].shape[1]
    a = p["wa2"].shape[1]
    n_out = _round_up(a + 1, 128)          # lane-dense output slab width
    h = 2 * fc3

    # Fused head layer 1: (fc2, 2*fc3); lanes [:fc3]=value hidden, [fc3:]=adv hidden.
    wh1 = jnp.concatenate([p["wv1"], p["wa1"]], axis=1)
    bh1 = jnp.concatenate([p["bv1"], p["ba1"]], axis=1)

    # Fused head layer 2, padded to a lane-full slab:
    #   output lanes 0..a-1 <- advantage head, lane a <- value head, rest zero.
    wh2 = jnp.zeros((h, n_out), jnp.float32)
    wh2 = wh2.at[fc3:, :a].set(p["wa2"])
    wh2 = wh2.at[:fc3, a].set(p["wv2"][:, 0])
    bh2 = jnp.zeros((1, n_out), jnp.float32)
    bh2 = bh2.at[0, :a].set(p["ba2"][0])
    bh2 = bh2.at[0, a].set(p["bv2"][0, 0])

    cast = lambda w: w.astype(matmul_dtype)
    return dict(w1=cast(p["w1"]), b1=p["b1"],
                w2=cast(p["w2"]), b2=p["b2"],
                wh1=cast(wh1), bh1=bh1,
                wh2=cast(wh2), bh2=bh2,
                action_size=int(a))


# ---------------------------------------------------------------------------
# Wrapper
# ---------------------------------------------------------------------------
def duel_q_forward(x, fused):
    """x: (B, state_size) f32. fused: output of prep_params."""
    b, s = x.shape
    a = fused["action_size"]
    n_out = fused["wh2"].shape[1]
    fc1 = fused["w1"].shape[1]
    fc2 = fused["w2"].shape[1]
    h = fused["wh1"].shape[1]

    # Batch tiling: TB multiple of 8, capped; pad B up to a TB multiple.
    tb = min(TB_MAX, _round_up(b, 8))
    b_pad = _round_up(b, tb)
    if b_pad != b:
        x = jnp.pad(x, ((0, b_pad - b), (0, 0)))
    n_tiles = b_pad // tb
    fuse_mean = (n_tiles == 1)     # common DQN case: whole batch in one tile
    inv_count = 1.0 / float(b * a)

    weight_args = (fused["w1"], fused["b1"], fused["w2"], fused["b2"],
                   fused["wh1"], fused["bh1"], fused["wh2"], fused["bh2"])

    def resident(arr):  # full-array block, stays in VMEM across all tiles
        return pl.BlockSpec(arr.shape, lambda i: (0, 0))

    param_bytes = sum(int(w.size) * int(jnp.dtype(w.dtype).itemsize)
                      for w in weight_args)
    flops = 2 * b_pad * (s * fc1 + fc1 * fc2 + fc2 * h + h * n_out)
    bytes_accessed = (int(x.size) * int(jnp.dtype(x.dtype).itemsize)
                      + param_bytes + 4 * b_pad * n_out + 4 * n_tiles)
    cost = pl.CostEstimate(flops=int(flops), transcendentals=0,
                           bytes_accessed=int(bytes_accessed))

    kernel = functools.partial(_fwd_kernel, tb=tb, n_valid=b, a=a,
                               inv_count=inv_count, fuse_mean=fuse_mean)

    q_slab, adv_sums = pl.pallas_call(
        kernel,
        out_shape=(jax.ShapeDtypeStruct((b_pad, n_out), jnp.float32),
                   jax.ShapeDtypeStruct((n_tiles, 1), jnp.float32)),
        grid=(n_tiles,),
        in_specs=[pl.BlockSpec((tb, s), lambda i: (i, 0))]
                 + [resident(w) for w in weight_args],
        out_specs=(pl.BlockSpec((tb, n_out), lambda i: (i, 0)),
                   pl.BlockSpec((1, 1), lambda i: (i, 0))),
        compiler_params=pltpu.CompilerParams(
            dimension_semantics=("parallel",),   # per-tile partials -> v7x megacore OK
            vmem_limit_bytes=VMEM_LIMIT),
        cost_estimate=cost,
    )(x, *weight_args)

    if fuse_mean:
        return q_slab[:b, :a]
    # Multi-tile batch: exact global mean from per-tile partial sums; this
    # trivial broadcast-subtract is left to XLA so it fuses with the slice
    # (and any downstream op) instead of costing another pallas_call.
    total = jnp.sum(adv_sums)
    return q_slab[:b, :a] - total * inv_count


# ---------------------------------------------------------------------------
# Parameter init (PyTorch nn.Linear shapes, pre-transposed) & JAX reference
# ---------------------------------------------------------------------------
def init_params(key, state_size, action_size, fc1=128, fc2=64, fc3=64):
    ks = jax.random.split(key, 12)

    def lin(kw, kb, n_in, n_out):
        bound = 1.0 / jnp.sqrt(jnp.float32(n_in))
        w = jax.random.uniform(kw, (n_in, n_out), jnp.float32, -bound, bound)
        b = jax.random.uniform(kb, (1, n_out), jnp.float32, -bound, bound)
        return w, b

    w1, b1 = lin(ks[0], ks[1], state_size, fc1)
    w2, b2 = lin(ks[2], ks[3], fc1, fc2)
    wv1, bv1 = lin(ks[4], ks[5], fc2, fc3)
    wv2, bv2 = lin(ks[6], ks[7], fc3, 1)
    wa1, ba1 = lin(ks[8], ks[9], fc2, fc3)
    wa2, ba2 = lin(ks[10], ks[11], fc3, action_size)

    return dict(w1=w1, b1=b1, w2=w2, b2=b2,
                wv1=wv1, bv1=bv1, wv2=wv2, bv2=bv2,
                wa1=wa1, ba1=ba1, wa2=wa2, ba2=ba2)


def duel_q_reference(x, p):
    """Pure-f32 JAX reference matching the PyTorch module (global adv mean)."""
    relu = lambda t: jnp.maximum(t, 0.0)
    h = relu(relu(x @ p["w1"] + p["b1"]) @ p["w2"] + p["b2"])
    v = relu(h @ p["wv1"] + p["bv1"]) @ p["wv2"] + p["bv2"]
    a = relu(h @ p["wa1"] + p["ba1"]) @ p["wa2"] + p["ba2"]
    return v + (a - jnp.mean(a))


if __name__ == "__main__":
    B, STATE_SIZE, ACTION_SIZE = 8, 16, 4

    key = jax.random.PRNGKey(0)
    k_x, k_p = jax.random.split(key)

    x = jax.random.normal(k_x, (B, STATE_SIZE), jnp.float32)
    params = init_params(k_p, STATE_SIZE, ACTION_SIZE)
    ref = duel_q_reference(x, params)

    # Exact-parity path (f32 matmul operands): tight tolerance.
    out_f32 = duel_q_forward(x, prep_params(params, matmul_dtype=jnp.float32))
    out_f32 = jax.block_until_ready(out_f32)
    assert out_f32.shape == (B, ACTION_SIZE)
    assert jnp.allclose(out_f32, ref, atol=1e-5, rtol=1e-5), "f32 mismatch vs reference"

    # Optimized path (bf16 matmul operands, f32 accumulation): looser tolerance.
    out_bf16 = duel_q_forward(x, prep_params(params))
    out_bf16 = jax.block_until_ready(out_bf16)
    assert out_bf16.shape == (B, ACTION_SIZE)
    assert jnp.allclose(out_bf16, ref, atol=5e-2, rtol=5e-2), "bf16 mismatch vs reference"

    print("KERNEL_OK")
</pallas_src>

<mosaic_0001>
module attributes {stable_mosaic.version = 11 : i64} {
  func.func @_fwd_kernel(%arg0: i32, %arg1: memref<8x16xf32, #tpu.memory_space<vmem>>, %arg2: memref<16x128xf32, #tpu.memory_space<vmem>>, %arg3: memref<1x128xf32, #tpu.memory_space<vmem>>, %arg4: memref<128x64xf32, #tpu.memory_space<vmem>>, %arg5: memref<1x64xf32, #tpu.memory_space<vmem>>, %arg6: memref<64x128xf32, #tpu.memory_space<vmem>>, %arg7: memref<1x128xf32, #tpu.memory_space<vmem>>, %arg8: memref<128x128xf32, #tpu.memory_space<vmem>>, %arg9: memref<1x128xf32, #tpu.memory_space<vmem>>, %arg10: memref<8x128xf32, #tpu.memory_space<vmem>>, %arg11: memref<1x1xf32, #tpu.memory_space<vmem>>) attributes {dimension_semantics = [#tpu.dimension_semantics<parallel>], iteration_bounds = array<i64: 1>, scalar_prefetch = 0 : i64, scratch_operands = 0 : i64, tpu.core_type = #tpu.core_type<tc>, window_params = [{transform_indices = @transform_0, window_bounds = array<i64: 8, 16>}, {pipeline_mode = #tpu.pipeline_mode<synchronous>, transform_indices = @transform_1, window_bounds = array<i64: 16, 128>}, {pipeline_mode = #tpu.pipeline_mode<synchronous>, transform_indices = @transform_2, window_bounds = array<i64: 1, 128>}, {pipeline_mode = #tpu.pipeline_mode<synchronous>, transform_indices = @transform_3, window_bounds = array<i64: 128, 64>}, {pipeline_mode = #tpu.pipeline_mode<synchronous>, transform_indices = @transform_4, window_bounds = array<i64: 1, 64>}, {pipeline_mode = #tpu.pipeline_mode<synchronous>, transform_indices = @transform_5, window_bounds = array<i64: 64, 128>}, {pipeline_mode = #tpu.pipeline_mode<synchronous>, transform_indices = @transform_6, window_bounds = array<i64: 1, 128>}, {pipeline_mode = #tpu.pipeline_mode<synchronous>, transform_indices = @transform_7, window_bounds = array<i64: 128, 128>}, {pipeline_mode = #tpu.pipeline_mode<synchronous>, transform_indices = @transform_8, window_bounds = array<i64: 1, 128>}, {transform_indices = @transform_9, window_bounds = array<i64: 8, 128>}, {transform_indices = @transform_10, window_bounds = array<i64: 1, 1>}]} {
    %c0 = arith.constant 0 : index
    %c0_0 = arith.constant 0 : index
    %0 = vector.load %arg1[%c0, %c0_0] : memref<8x16xf32, #tpu.memory_space<vmem>>, vector<8x16xf32>
    %c0_1 = arith.constant 0 : index
    %c0_2 = arith.constant 0 : index
    %1 = vector.load %arg2[%c0_1, %c0_2] : memref<16x128xf32, #tpu.memory_space<vmem>>, vector<16x128xf32>
    %cst = arith.constant dense<0.000000e+00> : vector<8x128xf32>
    %2 = tpu.matmul %0, %1, %cst {dimension_numbers = #tpu.dot_dimension_numbers<[1], [0], [0], [1], [0, 0, 1, 1], [], []>} : vector<8x16xf32>, vector<16x128xf32>, vector<8x128xf32> -> vector<8x128xf32>
    %c0_3 = arith.constant 0 : index
    %c0_4 = arith.constant 0 : index
    %3 = vector.load %arg3[%c0_3, %c0_4] : memref<1x128xf32, #tpu.memory_space<vmem>>, vector<1x128xf32>
    %4 = vector.broadcast %3 : vector<1x128xf32> to vector<8x128xf32>
    %5 = arith.addf %2, %4 : vector<8x128xf32>
    %cst_5 = arith.constant 0.000000e+00 : f32
    %6 = vector.broadcast %cst_5 : f32 to vector<8x128xf32>
    %7 = arith.maximumf %5, %6 : vector<8x128xf32>
    %c0_6 = arith.constant 0 : index
    %c0_7 = arith.constant 0 : index
    %8 = vector.load %arg4[%c0_6, %c0_7] : memref<128x64xf32, #tpu.memory_space<vmem>>, vector<128x64xf32>
    %cst_8 = arith.constant dense<0.000000e+00> : vector<8x64xf32>
    %9 = tpu.matmul %7, %8, %cst_8 {dimension_numbers = #tpu.dot_dimension_numbers<[1], [0], [0], [1], [0, 0, 1, 1], [], []>} : vector<8x128xf32>, vector<128x64xf32>, vector<8x64xf32> -> vector<8x64xf32>
    %c0_9 = arith.constant 0 : index
    %c0_10 = arith.constant 0 : index
    %10 = vector.load %arg5[%c0_9, %c0_10] : memref<1x64xf32, #tpu.memory_space<vmem>>, vector<1x64xf32>
    %11 = vector.broadcast %10 : vector<1x64xf32> to vector<8x64xf32>
    %12 = arith.addf %9, %11 : vector<8x64xf32>
    %cst_11 = arith.constant 0.000000e+00 : f32
    %13 = vector.broadcast %cst_11 : f32 to vector<8x64xf32>
    %14 = arith.maximumf %12, %13 : vector<8x64xf32>
    %c0_12 = arith.constant 0 : index
    %c0_13 = arith.constant 0 : index
    %15 = vector.load %arg6[%c0_12, %c0_13] : memref<64x128xf32, #tpu.memory_space<vmem>>, vector<64x128xf32>
    %cst_14 = arith.constant dense<0.000000e+00> : vector<8x128xf32>
    %16 = tpu.matmul %14, %15, %cst_14 {dimension_numbers = #tpu.dot_dimension_numbers<[1], [0], [0], [1], [0, 0, 1, 1], [], []>} : vector<8x64xf32>, vector<64x128xf32>, vector<8x128xf32> -> vector<8x128xf32>
    %c0_15 = arith.constant 0 : index
    %c0_16 = arith.constant 0 : index
    %17 = vector.load %arg7[%c0_15, %c0_16] : memref<1x128xf32, #tpu.memory_space<vmem>>, vector<1x128xf32>
    %18 = vector.broadcast %17 : vector<1x128xf32> to vector<8x128xf32>
    %19 = arith.addf %16, %18 : vector<8x128xf32>
    %cst_17 = arith.constant 0.000000e+00 : f32
    %20 = vector.broadcast %cst_17 : f32 to vector<8x128xf32>
    %21 = arith.maximumf %19, %20 : vector<8x128xf32>
    %c0_18 = arith.constant 0 : index
    %c0_19 = arith.constant 0 : index
    %22 = vector.load %arg8[%c0_18, %c0_19] : memref<128x128xf32, #tpu.memory_space<vmem>>, vector<128x128xf32>
    %cst_20 = arith.constant dense<0.000000e+00> : vector<8x128xf32>
    %23 = tpu.matmul %21, %22, %cst_20 {dimension_numbers = #tpu.dot_dimension_numbers<[1], [0], [0], [1], [0, 0, 1, 1], [], []>} : vector<8x128xf32>, vector<128x128xf32>, vector<8x128xf32> -> vector<8x128xf32>
    %c0_21 = arith.constant 0 : index
    %c0_22 = arith.constant 0 : index
    %24 = vector.load %arg9[%c0_21, %c0_22] : memref<1x128xf32, #tpu.memory_space<vmem>>, vector<1x128xf32>
    %25 = vector.broadcast %24 : vector<1x128xf32> to vector<8x128xf32>
    %26 = arith.addf %23, %25 : vector<8x128xf32>
    %27 = vector.extract_strided_slice %26 {offsets = [0, 4], sizes = [8, 1], strides = [1, 1]} : vector<8x128xf32> to vector<8x1xf32>
    %28 = vector.extract_strided_slice %26 {offsets = [0, 0], sizes = [8, 4], strides = [1, 1]} : vector<8x128xf32> to vector<8x4xf32>
    %c8_i32 = arith.constant 8 : i32
    %29 = arith.muli %arg0, %c8_i32 : i32
    %30 = tpu.iota {dimensions = array<i32: 0>} : vector<8x4xi32>
    %31 = vector.broadcast %29 : i32 to vector<8x4xi32>
    %32 = arith.addi %31, %30 : vector<8x4xi32>
    %c8_i32_23 = arith.constant 8 : i32
    %33 = vector.broadcast %c8_i32_23 : i32 to vector<8x4xi32>
    %34 = arith.cmpi slt, %32, %33 : vector<8x4xi32>
    %cst_24 = arith.constant 0.000000e+00 : f32
    %35 = vector.broadcast %cst_24 : f32 to vector<8x4xf32>
    %36 = arith.select %34, %28, %35 : vector<8x4xi1>, vector<8x4xf32>
    %37 = vector.shape_cast %36 : vector<8x4xf32> to vector<1x8x4xf32>
    %cst_25 = arith.constant dense<0.000000e+00> : vector<1xf32>
    %38 = vector.multi_reduction <add>, %37, %cst_25 [1, 2] : vector<1x8x4xf32> to vector<1xf32>
    %39 = vector.shape_cast %38 : vector<1xf32> to vector<1x1x1xf32>
    %40 = vector.extract %39[0, 0, 0] : f32 from vector<1x1x1xf32>
    %41 = vector.broadcast %40 : f32 to vector<1x1xf32>
    %c0_26 = arith.constant 0 : index
    %c0_27 = arith.constant 0 : index
    %42 = vector.load %arg11[%c0_26, %c0_27] : memref<1x1xf32, #tpu.memory_space<vmem>>, vector<1x1xf32>
    tpu.vector_store %arg11[%c0_26, %c0_27], %41 {strides = array<i32>} : memref<1x1xf32, #tpu.memory_space<vmem>>, vector<1x1xf32>,
    %43 = vector.broadcast %27 : vector<8x1xf32> to vector<8x128xf32>
    %44 = arith.addf %26, %43 : vector<8x128xf32>
    %cst_28 = arith.constant 3.125000e-02 : f32
    %45 = vector.broadcast %cst_28 : f32 to vector<1x1xf32>
    %46 = arith.mulf %41, %45 : vector<1x1xf32>
    %47 = vector.broadcast %46 : vector<1x1xf32> to vector<8x128xf32>
    %48 = arith.subf %44, %47 : vector<8x128xf32>
    %c0_29 = arith.constant 0 : index
    %c0_30 = arith.constant 0 : index
    %49 = vector.load %arg10[%c0_29, %c0_30] : memref<8x128xf32, #tpu.memory_space<vmem>>, vector<8x128xf32>
    tpu.vector_store %arg10[%c0_29, %c0_30], %48 {strides = array<i32>} : memref<8x128xf32, #tpu.memory_space<vmem>>, vector<8x128xf32>,
    return
  }
  func.func @transform_0(%arg0: i32) -> (i32, i32) {
    %c0_i32 = arith.constant 0 : i32
    %c0_i32_0 = arith.constant 0 : i32
    return %arg0, %c0_i32 : i32, i32
  }
  func.func @transform_1(%arg0: i32) -> (i32, i32) {
    %c0_i32 = arith.constant 0 : i32
    %c0_i32_0 = arith.constant 0 : i32
    %c0_i32_1 = arith.constant 0 : i32
    return %c0_i32, %c0_i32_0 : i32, i32
  }
  func.func @transform_2(%arg0: i32) -> (i32, i32) {
    %c0_i32 = arith.constant 0 : i32
    %c0_i32_0 = arith.constant 0 : i32
    %c0_i32_1 = arith.constant 0 : i32
    return %c0_i32, %c0_i32_0 : i32, i32
  }
  func.func @transform_3(%arg0: i32) -> (i32, i32) {
    %c0_i32 = arith.constant 0 : i32
    %c0_i32_0 = arith.constant 0 : i32
    %c0_i32_1 = arith.constant 0 : i32
    return %c0_i32, %c0_i32_0 : i32, i32
  }
  func.func @transform_4(%arg0: i32) -> (i32, i32) {
    %c0_i32 = arith.constant 0 : i32
    %c0_i32_0 = arith.constant 0 : i32
    %c0_i32_1 = arith.constant 0 : i32
    return %c0_i32, %c0_i32_0 : i32, i32
  }
  func.func @transform_5(%arg0: i32) -> (i32, i32) {
    %c0_i32 = arith.constant 0 : i32
    %c0_i32_0 = arith.constant 0 : i32
    %c0_i32_1 = arith.constant 0 : i32
    return %c0_i32, %c0_i32_0 : i32, i32
  }
  func.func @transform_6(%arg0: i32) -> (i32, i32) {
    %c0_i32 = arith.constant 0 : i32
    %c0_i32_0 = arith.constant 0 : i32
    %c0_i32_1 = arith.constant 0 : i32
    return %c0_i32, %c0_i32_0 : i32, i32
  }
  func.func @transform_7(%arg0: i32) -> (i32, i32) {
    %c0_i32 = arith.constant 0 : i32
    %c0_i32_0 = arith.constant 0 : i32
    %c0_i32_1 = arith.constant 0 : i32
    return %c0_i32, %c0_i32_0 : i32, i32
  }
  func.func @transform_8(%arg0: i32) -> (i32, i32) {
    %c0_i32 = arith.constant 0 : i32
    %c0_i32_0 = arith.constant 0 : i32
    %c0_i32_1 = arith.constant 0 : i32
    return %c0_i32, %c0_i32_0 : i32, i32
  }
  func.func @transform_9(%arg0: i32) -> (i32, i32) {
    %c0_i32 = arith.constant 0 : i32
    %c0_i32_0 = arith.constant 0 : i32
    return %arg0, %c0_i32 : i32, i32
  }
  func.func @transform_10(%arg0: i32) -> (i32, i32) {
    %c0_i32 = arith.constant 0 : i32
    %c0_i32_0 = arith.constant 0 : i32
    return %arg0, %c0_i32 : i32, i32
  }
}

</mosaic_0001>

<llo_original>
// kernel: tpu_custom_call.1
$region0: #{tpu_custom_call.1}
  #allocation0 [shape = 'u32[]', space=smem, size = 0x4, offset = 0x4, fixed_abs, tag = 'smem constant byte address 0x4 - core index']
  #allocation1 [shape = 'u32[144,128]{1,0:T(1,128)}', space=vmem, size = 0x12000, scoped, tag = 'internal scratch']
  %s0 = inlined_call_operand.vmem [shape: f32[8,16], index: 0, kind: input, shape index: {}]
  %s1 = inlined_call_operand.vmem [shape: f32[16,128], index: 1, kind: input, shape index: {}]
  %s2 = inlined_call_operand.vmem [shape: f32[1,128], index: 2, kind: input, shape index: {}]
  %s3 = inlined_call_operand.vmem [shape: f32[128,64], index: 3, kind: input, shape index: {}]
  %s4 = inlined_call_operand.vmem [shape: f32[1,64], index: 4, kind: input, shape index: {}]
  %s5 = inlined_call_operand.vmem [shape: f32[64,128], index: 5, kind: input, shape index: {}]
  %s6 = inlined_call_operand.hbm [shape: f32[1,128], index: 6, kind: input, shape index: {}]
  %s7 = inlined_call_operand.vmem [shape: f32[128,128], index: 7, kind: input, shape index: {}]
  %s8 = inlined_call_operand.vmem [shape: f32[1,128], index: 8, kind: input, shape index: {}]
  %s9 = inlined_call_operand.hbm [shape: f32[8,128], index: 9, kind: output, shape index: {0}]
  %s10 = inlined_call_operand.hbm [shape: f32[1,1], index: 10, kind: output, shape index: {1}]
  %11 = xla_tuple %s9, %s10
  %s12 = sld [smem:[#allocation0]]
  $region58: #{tpu_custom_call.1} parent=0
    _
  %s14 = ssub.s32 1, %s12
  %s15 = scalar_select 0, %s14, %s12
  $region1: #{tpu_custom_call.1} parent=0
    #allocation2 [shape = 'u8[512]{0}', space=vmem, size = 0x400, scoped, tag = 'input window, operand 6, single buffered']
    #allocation3 [shape = 's32[1]{0}', space=sflag, size = 0x4, scoped, tag = 'scoped memory for tpu_custom_call.1']
    #allocation4 [shape = 's32[1]{0}', space=sflag, size = 0x4, scoped, tag = 'scoped memory for tpu_custom_call.1']
    #allocation5 [shape = 'u8[4096]{0}', space=vmem, size = 0x1000, scoped, tag = 'output window, operand 0, single buffered']
    #allocation6 [shape = 'u8[512]{0}', space=vmem, size = 0x400, scoped, tag = 'output window, operand 1, single buffered']
    #allocation7 [shape = 's32[1]{0}', space=sflag, size = 0x4, scoped, tag = 'scoped memory for tpu_custom_call.1']
    %16 = vsyncpa [#allocation3], 0
    %17 = vsyncpa [#allocation4], 0
    %18 = vsyncpa [#allocation7], 0
    // Predicated region
    $region2: #{tpu_custom_call.1} parent=1 // pred_check
      _
    $region3: #{tpu_custom_call.1} parent=1 // pred_check_branch
      %20 = sbr.rel (0) target = $region5
    $region4: #{tpu_custom_call.1} parent=1 // pred_region
      _
    $region5: #{tpu_custom_call.1} parent=1 // pred_fallthru
      _
    // Predicated region
    $region6: #{tpu_custom_call.1} parent=1 // pred_check
      _
    $region7: #{tpu_custom_call.1} parent=1 // pred_check_branch
      %22 = sbr.rel (0) target = $region9
    $region8: #{tpu_custom_call.1} parent=1 // pred_region
      _
    $region9: #{tpu_custom_call.1} parent=1 // pred_fallthru
      _
    // Predicated region
    $region10: #{tpu_custom_call.1} parent=1 // pred_check
      _
    $region11: #{tpu_custom_call.1} parent=1 // pred_check_branch
      %24 = sbr.rel (0) target = $region13
    $region12: #{tpu_custom_call.1} parent=1 // pred_region
      _
    $region13: #{tpu_custom_call.1} parent=1 // pred_fallthru
      _
    // Predicated region
    $region14: #{tpu_custom_call.1} parent=1 // pred_check
      _
    $region15: #{tpu_custom_call.1} parent=1 // pred_check_branch
      %26 = sbr.rel (0) target = $region17
    $region16: #{tpu_custom_call.1} parent=1 // pred_region
      _
    $region17: #{tpu_custom_call.1} parent=1 // pred_fallthru
      _
    // Predicated region
    $region18: #{tpu_custom_call.1} parent=1 // pred_check
      _
    $region19: #{tpu_custom_call.1} parent=1 // pred_check_branch
      %28 = sbr.rel (0) target = $region21
    $region20: #{tpu_custom_call.1} parent=1 // pred_region
      _
    $region21: #{tpu_custom_call.1} parent=1 // pred_fallthru
      _
    // Predicated region
    $region22: #{tpu_custom_call.1} parent=1 // pred_check
      _
    $region23: #{tpu_custom_call.1} parent=1 // pred_check_branch
      %30 = sbr.rel (0) target = $region25
    $region24: #{tpu_custom_call.1} parent=1 // pred_region
      _
    $region25: #{tpu_custom_call.1} parent=1 // pred_fallthru
      _
    // Predicated region
    $region26: #{tpu_custom_call.1} parent=1 // pred_check
      _
    $region27: #{tpu_custom_call.1} parent=1 // pred_check_branch
      %32 = sbr.rel (0) target = $region29
    $region28: #{tpu_custom_call.1} parent=1 // pred_region
      %s34 = ssub.s32 16, 16
      %35 = vsyncadd [#allocation3], %s34
      %s37 = sshll.u32 [#allocation2], 4
      %s38 = int_to_ptr.vmem [resolvable:$true] %s37
      %40 = dma.hbm_to_vmem [thread:$0]  %s6, 16, %s38, [#allocation3]
    $region29: #{tpu_custom_call.1} parent=1 // pred_fallthru
      _
    // Predicated region
    $region30: #{tpu_custom_call.1} parent=1 // pred_check
      _
    $region31: #{tpu_custom_call.1} parent=1 // pred_check_branch
      %42 = sbr.rel (0) target = $region33
    $region32: #{tpu_custom_call.1} parent=1 // pred_region
      _
    $region33: #{tpu_custom_call.1} parent=1 // pred_fallthru
      _
    // Predicated region
    $region34: #{tpu_custom_call.1} parent=1 // pred_check
      _
    $region35: #{tpu_custom_call.1} parent=1 // pred_check_branch
      %44 = sbr.rel (0) target = $region37
    $region36: #{tpu_custom_call.1} parent=1 // pred_region
      _
    $region37: #{tpu_custom_call.1} parent=1 // pred_fallthru
      _
    // Predicated region
    $region38: #{tpu_custom_call.1} parent=1 // pred_check
      _
    $region39: #{tpu_custom_call.1} parent=1 // pred_check_branch
      %46 = sbr.rel (0) target = $region41
    $region40: #{tpu_custom_call.1} parent=1 // pred_region
      %47 = dma.done [#allocation3], 16
    $region41: #{tpu_custom_call.1} parent=1 // pred_fallthru
      _
    %v48 = vld [vmem:[%s0] sm:$0xff]
    %v49 = vld [vmem:[%s1] sm:$0xff]
    %v50 = vld [vmem:[%s1 + $0x8] sm:$0xff]
    %v51 = vld [vmem:[%s2] sm:$0x1]
    %v53 = vlaneseq
    %v54 = vshrl.u32 %v53, 7
    %v55 = vsub.s32 0, %v54
    %v56 = vrot.slane %v51, %v55
    %vm58 = vcmask 130048
    %v60 = vsel %vm58, %v48, 0
    %62 = vmatprep.subr.mxu0 0.0
    %63 = vmatpush1.msra.mxu0 %v49
    %64 = vmatprep.subr.mxu0 0.0
    %65 = vmatpush1.msra.mxu0 %v50
    %66 = vmatprep.subr.mxu0 0.0
    %67 = vmatpush1.msra.mxu0 0.0
    %68 = vmatprep.subr.mxu0 0.0
    %69 = vmatpush1.msra.mxu0 0.0
    %70 = vmatprep.subr.mxu0 0.0
    %71 = vmatpush1.msra.mxu0 0.0
    %72 = vmatprep.subr.mxu0 0.0
    %73 = vmatpush1.msra.mxu0 0.0
    %74 = vmatprep.subr.mxu0 0.0
    %75 = vmatpush1.msra.mxu0 0.0
    %76 = vmatprep.subr.mxu0 0.0
    %77 = vmatpush1.msra.mxu0 0.0
    %78 = vmatprep.subr.mxu0 0.0
    %79 = vmatpush1.msra.mxu0 0.0
    %80 = vmatprep.subr.mxu0 0.0
    %81 = vmatpush1.msra.mxu0 0.0
    %82 = vmatprep.subr.mxu0 0.0
    %83 = vmatpush1.msra.mxu0 0.0
    %84 = vmatprep.subr.mxu0 0.0
    %85 = vmatpush1.msra.mxu0 0.0
    %86 = vmatprep.subr.mxu0 0.0
    %87 = vmatpush1.msra.mxu0 0.0
    %88 = vmatprep.subr.mxu0 0.0
    %89 = vmatpush1.msra.mxu0 0.0
    %90 = vmatprep.subr.mxu0 0.0
    %91 = vmatpush1.msra.mxu0 0.0
    %92 = vmatprep.subr.mxu0 0.0
    %93 = vmatpush1.msra.mxu0 0.0
    %94 = vmatprep.subr.mxu0 0.0
    %95 = vmatpush1.msra.mxu0 0.0
    %96 = vmatprep.subr.mxu0 0.0
    %97 = vmatpush1.msra.mxu0 0.0
    %98 = vmatprep.subr.mxu0 0.0
    %99 = vmatpush1.msra.mxu0 0.0
    %100 = vmatprep.subr.mxu0 0.0
    %101 = vmatpush1.msra.mxu0 0.0
    %102 = vmatprep.subr.mxu0 0.0
    %103 = vmatpush1.msra.mxu0 0.0
    %104 = vmatprep.subr.mxu0 0.0
    %105 = vmatpush1.msra.mxu0 0.0
    %106 = vmatprep.subr.mxu0 0.0
    %107 = vmatpush1.msra.mxu0 0.0
    %108 = vmatprep.subr.mxu0 0.0
    %109 = vmatpush1.msra.mxu0 0.0
    %110 = vmatprep.subr.mxu0 0.0
    %111 = vmatpush1.msra.mxu0 0.0
    %112 = vmatprep.subr.mxu0 0.0
    %113 = vmatpush1.msra.mxu0 0.0
    %114 = vmatprep.subr.mxu0 0.0
    %115 = vmatpush1.msra.mxu0 0.0
    %116 = vmatprep.subr.mxu0 0.0
    %117 = vmatpush1.msra.mxu0 0.0
    %118 = vmatprep.subr.mxu0 0.0
    %119 = vmatpush1.msra.mxu0 0.0
    %120 = vmatprep.subr.mxu0 0.0
    %121 = vmatpush1.msra.mxu0 0.0
    %122 = vmatprep.subr.mxu0 0.0
    %123 = vmatpush1.msra.mxu0 0.0
    %124 = vmatprep.subr.mxu0 0.0
    %125 = vmatpush1.msra.mxu0 0.0
    %126 = vmatprep.mubr.f32.mxu0 0.0
    %127 = vmatmul.mubr.f32.gmra.mrb[0].mxu0 %v60
    %v128 = vpop.f32.mrb[0].mxu0
    %v129 = vadd.f32 %v56, %v128
    %v130 = vpop.f32.mrb[0].mxu0
    %131 = vdwg.mxu0
    %v132 = vmax.f32 %v129, 0.0
    %v133 = vld [vmem:[%s3] sm:$0xff]
    %v134 = vld [vmem:[%s3 + $0x8] sm:$0xff]
    %v135 = vld [vmem:[%s3 + $0x10] sm:$0xff]
    %v136 = vld [vmem:[%s3 + $0x18] sm:$0xff]
    %v137 = vld [vmem:[%s3 + $0x20] sm:$0xff]
    %v138 = vld [vmem:[%s3 + $0x28] sm:$0xff]
    %v139 = vld [vmem:[%s3 + $0x30] sm:$0xff]
    %v140 = vld [vmem:[%s3 + $0x38] sm:$0xff]
    %v141 = vld [vmem:[%s3 + $0x40] sm:$0xff]
    %v142 = vld [vmem:[%s3 + $0x48] sm:$0xff]
    %v143 = vld [vmem:[%s3 + $0x50] sm:$0xff]
    %v144 = vld [vmem:[%s3 + $0x58] sm:$0xff]
    %v145 = vld [vmem:[%s3 + $0x60] sm:$0xff]
    %v146 = vld [vmem:[%s3 + $0x68] sm:$0xff]
    %v147 = vld [vmem:[%s3 + $0x70] sm:$0xff]
    %v148 = vld [vmem:[%s3 + $0x78] sm:$0xff]
    %v149 = vld [vmem:[%s4] sm:$0x1]
    %v151 = vlaneseq
    %v152 = vshrl.u32 %v151, 7
    %v153 = vsub.s32 0, %v152
    %v154 = vrot.slane %v149, %v153
    %156 = vmatprep.subr.mxu0 0.0
    %157 = vmatpush1.msra.mxu0 %v133
    %158 = vmatprep.subr.mxu0 0.0
    %159 = vmatpush1.msra.mxu0 %v134
    %160 = vmatprep.subr.mxu0 0.0
    %161 = vmatpush1.msra.mxu0 %v135
    %162 = vmatprep.subr.mxu0 0.0
    %163 = vmatpush1.msra.mxu0 %v136
    %164 = vmatprep.subr.mxu0 0.0
    %165 = vmatpush1.msra.mxu0 %v137
    %166 = vmatprep.subr.mxu0 0.0
    %167 = vmatpush1.msra.mxu0 %v138
    %168 = vmatprep.subr.mxu0 0.0
    %169 = vmatpush1.msra.mxu0 %v139
    %170 = vmatprep.subr.mxu0 0.0
    %171 = vmatpush1.msra.mxu0 %v140
    %172 = vmatprep.subr.mxu0 0.0
    %173 = vmatpush1.msra.mxu0 %v141
    %174 = vmatprep.subr.mxu0 0.0
    %175 = vmatpush1.msra.mxu0 %v142
    %176 = vmatprep.subr.mxu0 0.0
    %177 = vmatpush1.msra.mxu0 %v143
    %178 = vmatprep.subr.mxu0 0.0
    %179 = vmatpush1.msra.mxu0 %v144
    %180 = vmatprep.subr.mxu0 0.0
    %181 = vmatpush1.msra.mxu0 %v145
    %182 = vmatprep.subr.mxu0 0.0
    %183 = vmatpush1.msra.mxu0 %v146
    %184 = vmatprep.subr.mxu0 0.0
    %185 = vmatpush1.msra.mxu0 %v147
    %186 = vmatprep.subr.mxu0 0.0
    %187 = vmatpush1.msra.mxu0 %v148
    %188 = vmatprep.subr.mxu0 0.0
    %189 = vmatpush1.msra.mxu0 0.0
    %190 = vmatprep.subr.mxu0 0.0
    %191 = vmatpush1.msra.mxu0 0.0
    %192 = vmatprep.subr.mxu0 0.0
    %193 = vmatpush1.msra.mxu0 0.0
    %194 = vmatprep.subr.mxu0 0.0
    %195 = vmatpush1.msra.mxu0 0.0
    %196 = vmatprep.subr.mxu0 0.0
    %197 = vmatpush1.msra.mxu0 0.0
    %198 = vmatprep.subr.mxu0 0.0
    %199 = vmatpush1.msra.mxu0 0.0
    %200 = vmatprep.subr.mxu0 0.0
    %201 = vmatpush1.msra.mxu0 0.0
    %202 = vmatprep.subr.mxu0 0.0
    %203 = vmatpush1.msra.mxu0 0.0
    %204 = vmatprep.subr.mxu0 0.0
    %205 = vmatpush1.msra.mxu0 0.0
    %206 = vmatprep.subr.mxu0 0.0
    %207 = vmatpush1.msra.mxu0 0.0
    %208 = vmatprep.subr.mxu0 0.0
    %209 = vmatpush1.msra.mxu0 0.0
    %210 = vmatprep.subr.mxu0 0.0
    %211 = vmatpush1.msra.mxu0 0.0
    %212 = vmatprep.subr.mxu0 0.0
    %213 = vmatpush1.msra.mxu0 0.0
    %214 = vmatprep.subr.mxu0 0.0
    %215 = vmatpush1.msra.mxu0 0.0
    %216 = vmatprep.subr.mxu0 0.0
    %217 = vmatpush1.msra.mxu0 0.0
    %218 = vmatprep.subr.mxu0 0.0
    %219 = vmatpush1.msra.mxu0 0.0
    %220 = vmatprep.mubr.f32.mxu0 0.0
    %221 = vmatmul.mubr.f32.gmra.mrb[0].mxu0 %v132
    %v222 = vpop.f32.mrb[0].mxu0
    %v223 = vadd.f32 %v154, %v222
    %v224 = vpop.f32.mrb[0].mxu0
    %225 = vdwg.mxu0
    %v226 = vmax.f32 %v223, 0.0
    %v227 = vld [vmem:[%s5] sm:$0xff]
    %v228 = vld [vmem:[%s5 + $0x8] sm:$0xff]
    %v229 = vld [vmem:[%s5 + $0x10] sm:$0xff]
    %v230 = vld [vmem:[%s5 + $0x18] sm:$0xff]
    %v231 = vld [vmem:[%s5 + $0x20] sm:$0xff]
    %v232 = vld [vmem:[%s5 + $0x28] sm:$0xff]
    %v233 = vld [vmem:[%s5 + $0x30] sm:$0xff]
    %v234 = vld [vmem:[%s5 + $0x38] sm:$0xff]
    %v235 = vld [vmem:[#allocation2] sm:$0x1]
    %v237 = vlaneseq
    %v238 = vshrl.u32 %v237, 7
    %v239 = vsub.s32 0, %v238
    %v240 = vrot.slane %v235, %v239
    %vm242 = vcmask 523264
    %v244 = vsel %vm242, %v226, 0
    %246 = vmatprep.subr.mxu0 0.0
    %247 = vmatpush1.msra.mxu0 %v227
    %248 = vmatprep.subr.mxu0 0.0
    %249 = vmatpush1.msra.mxu0 %v228
    %250 = vmatprep.subr.mxu0 0.0
    %251 = vmatpush1.msra.mxu0 %v229
    %252 = vmatprep.subr.mxu0 0.0
    %253 = vmatpush1.msra.mxu0 %v230
    %254 = vmatprep.subr.mxu0 0.0
    %255 = vmatpush1.msra.mxu0 %v231
    %256 = vmatprep.subr.mxu0 0.0
    %257 = vmatpush1.msra.mxu0 %v232
    %258 = vmatprep.subr.mxu0 0.0
    %259 = vmatpush1.msra.mxu0 %v233
    %260 = vmatprep.subr.mxu0 0.0
    %261 = vmatpush1.msra.mxu0 %v234
    %262 = vmatprep.subr.mxu0 0.0
    %263 = vmatpush1.msra.mxu0 0.0
    %264 = vmatprep.subr.mxu0 0.0
    %265 = vmatpush1.msra.mxu0 0.0
    %266 = vmatprep.subr.mxu0 0.0
    %267 = vmatpush1.msra.mxu0 0.0
    %268 = vmatprep.subr.mxu0 0.0
    %269 = vmatpush1.msra.mxu0 0.0
    %270 = vmatprep.subr.mxu0 0.0
    %271 = vmatpush1.msra.mxu0 0.0
    %272 = vmatprep.subr.mxu0 0.0
    %273 = vmatpush1.msra.mxu0 0.0
    %274 = vmatprep.subr.mxu0 0.0
    %275 = vmatpush1.msra.mxu0 0.0
    %276 = vmatprep.subr.mxu0 0.0
    %277 = vmatpush1.msra.mxu0 0.0
    %278 = vmatprep.subr.mxu0 0.0
    %279 = vmatpush1.msra.mxu0 0.0
    %280 = vmatprep.subr.mxu0 0.0
    %281 = vmatpush1.msra.mxu0 0.0
    %282 = vmatprep.subr.mxu0 0.0
    %283 = vmatpush1.msra.mxu0 0.0
    %284 = vmatprep.subr.mxu0 0.0
    %285 = vmatpush1.msra.mxu0 0.0
    %286 = vmatprep.subr.mxu0 0.0
    %287 = vmatpush1.msra.mxu0 0.0
    %288 = vmatprep.subr.mxu0 0.0
    %289 = vmatpush1.msra.mxu0 0.0
    %290 = vmatprep.subr.mxu0 0.0
    %291 = vmatpush1.msra.mxu0 0.0
    %292 = vmatprep.subr.mxu0 0.0
    %293 = vmatpush1.msra.mxu0 0.0
    %294 = vmatprep.subr.mxu0 0.0
    %295 = vmatpush1.msra.mxu0 0.0
    %296 = vmatprep.subr.mxu0 0.0
    %297 = vmatpush1.msra.mxu0 0.0
    %298 = vmatprep.subr.mxu0 0.0
    %299 = vmatpush1.msra.mxu0 0.0
    %300 = vmatprep.subr.mxu0 0.0
    %301 = vmatpush1.msra.mxu0 0.0
    %302 = vmatprep.subr.mxu0 0.0
    %303 = vmatpush1.msra.mxu0 0.0
    %304 = vmatprep.subr.mxu0 0.0
    %305 = vmatpush1.msra.mxu0 0.0
    %306 = vmatprep.subr.mxu0 0.0
    %307 = vmatpush1.msra.mxu0 0.0
    %308 = vmatprep.subr.mxu0 0.0
    %309 = vmatpush1.msra.mxu0 0.0
    %310 = vmatprep.mubr.f32.mxu0 0.0
    %311 = vmatmul.mubr.f32.gmra.mrb[0].mxu0 %v244
    %v312 = vpop.f32.mrb[0].mxu0
    %v313 = vadd.f32 %v240, %v312
    %v314 = vpop.f32.mrb[0].mxu0
    %315 = vdwg.mxu0
    %v316 = vmax.f32 %v313, 0.0
    %v317 = vld [vmem:[%s7] sm:$0xff]
    %v318 = vld [vmem:[%s7 + $0x8] sm:$0xff]
    %v319 = vld [vmem:[%s7 + $0x10] sm:$0xff]
    %v320 = vld [vmem:[%s7 + $0x18] sm:$0xff]
    %v321 = vld [vmem:[%s7 + $0x20] sm:$0xff]
    %v322 = vld [vmem:[%s7 + $0x28] sm:$0xff]
    %v323 = vld [vmem:[%s7 + $0x30] sm:$0xff]
    %v324 = vld [vmem:[%s7 + $0x38] sm:$0xff]
    %v325 = vld [vmem:[%s7 + $0x40] sm:$0xff]
    %v326 = vld [vmem:[%s7 + $0x48] sm:$0xff]
    %v327 = vld [vmem:[%s7 + $0x50] sm:$0xff]
    %v328 = vld [vmem:[%s7 + $0x58] sm:$0xff]
    %v329 = vld [vmem:[%s7 + $0x60] sm:$0xff]
    %v330 = vld [vmem:[%s7 + $0x68] sm:$0xff]
    %v331 = vld [vmem:[%s7 + $0x70] sm:$0xff]
    %v332 = vld [vmem:[%s7 + $0x78] sm:$0xff]
    %v333 = vld [vmem:[%s8] sm:$0x1]
    %v335 = vlaneseq
    %v336 = vshrl.u32 %v335, 7
    %v337 = vsub.s32 0, %v336
    %v338 = vrot.slane %v333, %v337
    %340 = vmatprep.subr.mxu0 0.0
    %341 = vmatpush1.msra.mxu0 %v317
    %342 = vmatprep.subr.mxu0 0.0
    %343 = vmatpush1.msra.mxu0 %v318
    %344 = vmatprep.subr.mxu0 0.0
    %345 = vmatpush1.msra.mxu0 %v319
    %346 = vmatprep.subr.mxu0 0.0
    %347 = vmatpush1.msra.mxu0 %v320
    %348 = vmatprep.subr.mxu0 0.0
    %349 = vmatpush1.msra.mxu0 %v321
    %350 = vmatprep.subr.mxu0 0.0
    %351 = vmatpush1.msra.mxu0 %v322
    %352 = vmatprep.subr.mxu0 0.0
    %353 = vmatpush1.msra.mxu0 %v323
    %354 = vmatprep.subr.mxu0 0.0
    %355 = vmatpush1.msra.mxu0 %v324
    %356 = vmatprep.subr.mxu0 0.0
    %357 = vmatpush1.msra.mxu0 %v325
    %358 = vmatprep.subr.mxu0 0.0
    %359 = vmatpush1.msra.mxu0 %v326
    %360 = vmatprep.subr.mxu0 0.0
    %361 = vmatpush1.msra.mxu0 %v327
    %362 = vmatprep.subr.mxu0 0.0
    %363 = vmatpush1.msra.mxu0 %v328
    %364 = vmatprep.subr.mxu0 0.0
    %365 = vmatpush1.msra.mxu0 %v329
    %366 = vmatprep.subr.mxu0 0.0
    %367 = vmatpush1.msra.mxu0 %v330
    %368 = vmatprep.subr.mxu0 0.0
    %369 = vmatpush1.msra.mxu0 %v331
    %370 = vmatprep.subr.mxu0 0.0
    %371 = vmatpush1.msra.mxu0 %v332
    %372 = vmatprep.subr.mxu0 0.0
    %373 = vmatpush1.msra.mxu0 0.0
    %374 = vmatprep.subr.mxu0 0.0
    %375 = vmatpush1.msra.mxu0 0.0
    %376 = vmatprep.subr.mxu0 0.0
    %377 = vmatpush1.msra.mxu0 0.0
    %378 = vmatprep.subr.mxu0 0.0
    %379 = vmatpush1.msra.mxu0 0.0
    %380 = vmatprep.subr.mxu0 0.0
    %381 = vmatpush1.msra.mxu0 0.0
    %382 = vmatprep.subr.mxu0 0.0
    %383 = vmatpush1.msra.mxu0 0.0
    %384 = vmatprep.subr.mxu0 0.0
    %385 = vmatpush1.msra.mxu0 0.0
    %386 = vmatprep.subr.mxu0 0.0
    %387 = vmatpush1.msra.mxu0 0.0
    %388 = vmatprep.subr.mxu0 0.0
    %389 = vmatpush1.msra.mxu0 0.0
    %390 = vmatprep.subr.mxu0 0.0
    %391 = vmatpush1.msra.mxu0 0.0
    %392 = vmatprep.subr.mxu0 0.0
    %393 = vmatpush1.msra.mxu0 0.0
    %394 = vmatprep.subr.mxu0 0.0
    %395 = vmatpush1.msra.mxu0 0.0
    %396 = vmatprep.subr.mxu0 0.0
    %397 = vmatpush1.msra.mxu0 0.0
    %398 = vmatprep.subr.mxu0 0.0
    %399 = vmatpush1.msra.mxu0 0.0
    %400 = vmatprep.subr.mxu0 0.0
    %401 = vmatpush1.msra.mxu0 0.0
    %402 = vmatprep.subr.mxu0 0.0
    %403 = vmatpush1.msra.mxu0 0.0
    %404 = vmatprep.mubr.f32.mxu0 0.0
    %405 = vmatmul.mubr.f32.gmra.mrb[0].mxu0 %v316
    %v406 = vpop.f32.mrb[0].mxu0
    %v407 = vadd.f32 %v338, %v406
    %v408 = vpop.f32.mrb[0].mxu0
    %409 = vdwg.mxu0
    %s410 = smul.u32 0, 8
    %v411 = vlaneseq
    %v412 = vshrl.u32 %v411, 7
    %v413 = vstv %s410
    %v414 = vadd.s32 %v413, %v412
    %vm415 = vcmp.lt.s32.totalorder %v414, 8
    %v416 = vsel %vm415, %v407, 0.0
    %vm417 = vcmask 31744
    %v418 = vsel %vm417, %v416, 0.0
    %419 = vadd.xlane.f32.xlu0 %v418
    %v420 = vpop.xlane.xlu0 %419
    %v421 = vrot.slane %v420, 4
    %v422 = vadd.f32 %v420, %v421
    %v423 = vrot.slane %v422, 2
    %v424 = vadd.f32 %v422, %v423
    %v425 = vrot.slane %v424, 1
    %v426 = vadd.f32 %v424, %v425
    %s427 = vtos %v426
    %v428 = vstv %s427
    %vm429 = vcmask 0
    %430 = vst.msk [vmem:[#allocation6] sm:$0x1] %vm429, %v428
    %432 = vset.pattern.permute.xlu0 4
    %433 = vperm.xlu0 %432, %v407
    %v434 = vpop.permute.xlu0 %433
    %v436 = vadd.f32 %v407, %v434
    %v437 = vmul.f32 %v428, 0.03125
    %v438 = vsub.f32 %v436, %v437
    %439 = vst [vmem:[#allocation5] sm:$0xff] %v438
    // Predicated region
    $region42: #{tpu_custom_call.1} parent=1 // pred_check
      _
    $region43: #{tpu_custom_call.1} parent=1 // pred_check_branch
      %441 = sbr.rel (0) target = $region45
    $region44: #{tpu_custom_call.1} parent=1 // pred_region
      %s443 = ssub.s32 128, 128
      %444 = vsyncadd [#allocation4], %s443
      %s446 = sshll.u32 [#allocation5], 4
      %s447 = int_to_ptr.vmem [resolvable:$true] %s446
      %449 = dma.vmem_to_hbm [thread:$0]  %s447, 128, %s9, [#allocation4]
    $region45: #{tpu_custom_call.1} parent=1 // pred_fallthru
      _
    // Predicated region
    $region46: #{tpu_custom_call.1} parent=1 // pred_check
      _
    $region47: #{tpu_custom_call.1} parent=1 // pred_check_branch
      %451 = sbr.rel (0) target = $region49
    $region48: #{tpu_custom_call.1} parent=1 // pred_region
      %s453 = ssub.s32 16, 16
      %454 = vsyncadd [#allocation7], %s453
      %s456 = sshll.u32 [#allocation6], 4
      %s457 = int_to_ptr.vmem [resolvable:$true] %s456
      %459 = dma.vmem_to_hbm [thread:$0]  %s457, 16, %s10, [#allocation7]
    $region49: #{tpu_custom_call.1} parent=1 // pred_fallthru
      _
    // Predicated region
    $region50: #{tpu_custom_call.1} parent=1 // pred_check
      _
    $region51: #{tpu_custom_call.1} parent=1 // pred_check_branch
      %461 = sbr.rel (0) target = $region53
    $region52: #{tpu_custom_call.1} parent=1 // pred_region
      %462 = dma.done [#allocation4], 128
    $region53: #{tpu_custom_call.1} parent=1 // pred_fallthru
      _
    // Predicated region
    $region54: #{tpu_custom_call.1} parent=1 // pred_check
      _
    $region55: #{tpu_custom_call.1} parent=1 // pred_check_branch
      %464 = sbr.rel (0) target = $region57
    $region56: #{tpu_custom_call.1} parent=1 // pred_region
      %465 = dma.done [#allocation7], 16
    $region57: #{tpu_custom_call.1} parent=1 // pred_fallthru
      _
    %466 = vsyncpa [#allocation3], 1
    %467 = vsyncpa [#allocation4], 1
    %468 = vsyncpa [#allocation7], 1

</llo_original>
